<compile_context>
chip_gen: v6e
topology: v6e:2x2x1
jax: 0.10.0
libtpu: 0.0.40
codegen_flags: <defaults>
</compile_context>

<pallas_src>
import functools

import jax
import jax.numpy as jnp
from jax.experimental import pallas as pl
from jax.experimental.pallas import tpu as pltpu


def dqn_mlp_kernel(xT_ref, w1_ref, b1_ref, w2_ref, w3_ref, oT_ref):
    # Batch lives on the lane (last) axis of every operand/result, so every
    # matmul N dim and the final store are lane-dense.
    cdt = w1_ref.dtype
    xT = xT_ref[...].astype(cdt)                                        # (in, TB)
    # Layer 1: the bias add also seeds the constant-1 row (last row of W1 is
    # zero, last entry of b1 is 1), which layers 2/3 use to fold their biases
    # into the contraction.
    h1 = jnp.dot(w1_ref[...], xT, preferred_element_type=jnp.float32)   # (H+1, TB)
    h1 = jnp.maximum(h1 + b1_ref[...], 0.0).astype(cdt)
    # Layers 2/3: biases already inside the GEMM (bias column x ones row).
    h2 = jnp.dot(w2_ref[...], h1, preferred_element_type=jnp.float32)   # (H+1, TB)
    h2 = jnp.maximum(h2, 0.0).astype(cdt)
    out = jnp.dot(w3_ref[...], h2, preferred_element_type=jnp.float32)  # (out, TB)
    oT_ref[...] = out.astype(oT_ref.dtype)


def _round_up(v, m):
    return ((v + m - 1) // m) * m


def _pick_batch_tile(B):
    """Batch tile: multiple of 128; fill the 256-wide MXU N dim on v6e/v7x but
    keep >=2 grid steps whenever Bp >= 256 so both v7x TensorCores get work."""
    Bp = _round_up(B, 128)
    if Bp <= 256:
        return 128
    return min(512, _round_up(Bp // 2, 128))


def prepare_dqn_params(params, compute_dtype=jnp.bfloat16):
    """One-time augmentation + cast (hoisted out of the per-call path).

    Builds:
      W1a = [W1; 0]        (H+1, in)    b1a = [b1; 1]  (H+1, 1)  kept f32
      W2a = [[W2, b2],
             [0 ,  1]]     (H+1, H+1)
      W3a = [W3, b3]       (out, H+1)
    so that h1a = ReLU(W1a x^T + b1a) carries a constant-1 last row and the
    layer-2/3 biases fold into their GEMMs.
    """
    w1, b1, w2, b2, w3, b3 = params
    hidden = w1.shape[0]

    w1a = jnp.concatenate([w1, jnp.zeros((1, w1.shape[1]), w1.dtype)], axis=0)
    b1a = jnp.concatenate([b1, jnp.ones((1, 1), b1.dtype)], axis=0)

    w2a = jnp.concatenate([w2, b2], axis=1)                       # (H, H+1)
    ones_row = jnp.zeros((1, hidden + 1), w2.dtype).at[0, hidden].set(1.0)
    w2a = jnp.concatenate([w2a, ones_row], axis=0)                # (H+1, H+1)

    w3a = jnp.concatenate([w3, b3], axis=1)                       # (out, H+1)

    return (w1a.astype(compute_dtype),
            b1a.astype(jnp.float32),                              # f32 add in-kernel
            w2a.astype(compute_dtype),
            w3a.astype(compute_dtype))


@functools.partial(jax.jit, static_argnames=("transpose_output",))
def dqn_forward(x, prepared, *, transpose_output=True):
    """Fused 3-layer MLP forward.

    x: (B, in_features) f32.  prepared: output of prepare_dqn_params.
    Returns (B, out_features) f32, or the lane-dense (out_features, B) slab if
    transpose_output=False (skips one wrapper-side XLA transpose).
    """
    w1a, b1a, w2a, w3a = prepared
    B, in_dim = x.shape
    ha = w1a.shape[0]            # hidden + 1
    out_dim = w3a.shape[0]

    tb = _pick_batch_tile(B)
    n_tiles = pl.cdiv(B, tb)
    Bp = n_tiles * tb

    # Layout plumbing only: batch onto the lane axis (cast happens in-kernel).
    xT = x.T
    if Bp != B:
        xT = jnp.pad(xT, ((0, 0), (0, Bp - B)))

    itemsize = jnp.dtype(w1a.dtype).itemsize
    flops = 2 * Bp * (in_dim * ha + ha * ha + ha * out_dim)
    bytes_accessed = (
        xT.size * 4
        + (w1a.size + w2a.size + w3a.size) * itemsize
        + b1a.size * 4
        + out_dim * Bp * 4
    )

    resident = lambda i: (0, 0)  # weights/biases: same block every step -> stay in VMEM

    outT = pl.pallas_call(
        dqn_mlp_kernel,
        out_shape=jax.ShapeDtypeStruct((out_dim, Bp), jnp.float32),
        grid_spec=pltpu.PrefetchScalarGridSpec(
            num_scalar_prefetch=0,
            grid=(n_tiles,),
            in_specs=[
                pl.BlockSpec((in_dim, tb), lambda i: (0, i)),   # x^T batch tile (f32)
                pl.BlockSpec((ha, in_dim), resident),           # W1 (augmented)
                pl.BlockSpec((ha, 1), resident),                # b1 (augmented, f32)
                pl.BlockSpec((ha, ha), resident),               # W2 (bias folded)
                pl.BlockSpec((out_dim, ha), resident),          # W3 (bias folded)
            ],
            out_specs=pl.BlockSpec((out_dim, tb), lambda i: (0, i)),
        ),
        compiler_params=pltpu.CompilerParams(
            dimension_semantics=("parallel",),   # batch tiles shard across v7x TCs
        ),
        cost_estimate=pl.CostEstimate(
            flops=flops, transcendentals=0, bytes_accessed=bytes_accessed
        ),
    )(xT, w1a, b1a, w2a, w3a)

    outT = outT[:, :B]
    return outT.T if transpose_output else outT


def init_dqn_params(key, sizes, hidden=32):
    """nn.Linear-style init (uniform +/- 1/sqrt(fan_in)); weights stored (out, in)."""
    in_dim, out_dim = sizes
    dims = [(in_dim, hidden), (hidden, hidden), (hidden, out_dim)]
    params = []
    for fan_in, fan_out in dims:
        key, kw, kb = jax.random.split(key, 3)
        bound = 1.0 / jnp.sqrt(float(fan_in))
        w = jax.random.uniform(kw, (fan_out, fan_in), jnp.float32, -bound, bound)
        b = jax.random.uniform(kb, (fan_out, 1), jnp.float32, -bound, bound)
        params += [w, b]
    return tuple(params)


def dqn_forward_ref(x, params, compute_dtype=jnp.float32):
    """Pure-JAX reference; with compute_dtype=bf16 it mirrors the kernel's
    quantization (layer-1 bias f32, layer-2/3 biases go through the MXU dtype)."""
    w1, b1, w2, b2, w3, b3 = params
    cd = compute_dtype
    f32 = jnp.float32
    h1 = jnp.maximum(
        jnp.dot(x.astype(cd), w1.T.astype(cd), preferred_element_type=f32) + b1.T, 0.0)
    h2 = jnp.maximum(
        jnp.dot(h1.astype(cd), w2.T.astype(cd), preferred_element_type=f32)
        + b2.T.astype(cd).astype(f32), 0.0)
    return (jnp.dot(h2.astype(cd), w3.T.astype(cd), preferred_element_type=f32)
            + b3.T.astype(cd).astype(f32))


if __name__ == "__main__":
    key = jax.random.PRNGKey(0)
    sizes = (4, 2)   # CartPole-like: 4 observations -> 2 actions
    hidden = 32

    key, kp = jax.random.split(key)
    params = init_dqn_params(kp, sizes, hidden)

    # One-time param prep (cast/augment hoisted out of the per-call path).
    prepared_bf16 = prepare_dqn_params(params, jnp.bfloat16)
    prepared_f32 = prepare_dqn_params(params, jnp.float32)   # exact path for training-grade Q-values

    # Replay batch (32), lane-filling batch (256, 2 grid steps), and a larger
    # batch (512) that exercises the 256-wide tile selection.
    for batch in (32, 256, 512):
        key, kx = jax.random.split(key)
        x = jax.random.normal(kx, (batch, sizes[0]), jnp.float32)

        out = jax.block_until_ready(dqn_forward(x, prepared_bf16))
        assert out.shape == (batch, sizes[1])

        ref_bf16 = dqn_forward_ref(x, params, compute_dtype=jnp.bfloat16)
        ref_f32 = dqn_forward_ref(x, params, compute_dtype=jnp.float32)
        assert jnp.allclose(out, ref_bf16, atol=1e-2, rtol=1e-2), \
            f"mismatch vs bf16-matched reference (B={batch})"
        assert jnp.allclose(out, ref_f32, atol=5e-2, rtol=5e-2), \
            f"mismatch vs f32 reference (B={batch})"

        # f32-weight path through the same kernel (for loss/target computation).
        out_f32 = jax.block_until_ready(dqn_forward(x, prepared_f32))
        assert jnp.allclose(out_f32, ref_f32, atol=1e-4, rtol=1e-4), \
            f"mismatch on f32 compute path (B={batch})"

    # Lane-dense slab output (no wrapper transpose), for callers that can
    # consume (out_features, B) directly.
    out_slab = jax.block_until_ready(
        dqn_forward(x, prepared_bf16, transpose_output=False))
    assert out_slab.shape == (sizes[1], x.shape[0])

    print("KERNEL_OK")
</pallas_src>

<mosaic_0001>
module attributes {stable_mosaic.version = 11 : i64} {
  func.func @dqn_mlp_kernel(%arg0: i32, %arg1: memref<4x128xf32, #tpu.memory_space<vmem>>, %arg2: memref<33x4xbf16, #tpu.memory_space<vmem>>, %arg3: memref<33x1xf32, #tpu.memory_space<vmem>>, %arg4: memref<33x33xbf16, #tpu.memory_space<vmem>>, %arg5: memref<2x33xbf16, #tpu.memory_space<vmem>>, %arg6: memref<2x128xf32, #tpu.memory_space<vmem>>) attributes {dimension_semantics = [#tpu.dimension_semantics<parallel>], iteration_bounds = array<i64: 1>, scalar_prefetch = 0 : i64, scratch_operands = 0 : i64, tpu.core_type = #tpu.core_type<tc>, window_params = [{transform_indices = @transform_0, window_bounds = array<i64: 4, 128>}, {pipeline_mode = #tpu.pipeline_mode<synchronous>, transform_indices = @transform_1, window_bounds = array<i64: 33, 4>}, {pipeline_mode = #tpu.pipeline_mode<synchronous>, transform_indices = @transform_2, window_bounds = array<i64: 33, 1>}, {pipeline_mode = #tpu.pipeline_mode<synchronous>, transform_indices = @transform_3, window_bounds = array<i64: 33, 33>}, {pipeline_mode = #tpu.pipeline_mode<synchronous>, transform_indices = @transform_4, window_bounds = array<i64: 2, 33>}, {transform_indices = @transform_5, window_bounds = array<i64: 2, 128>}]} {
    %c0 = arith.constant 0 : index
    %c0_0 = arith.constant 0 : index
    %0 = vector.load %arg1[%c0, %c0_0] : memref<4x128xf32, #tpu.memory_space<vmem>>, vector<4x128xf32>
    %1 = arith.truncf %0 : vector<4x128xf32> to vector<4x128xbf16>
    %c0_1 = arith.constant 0 : index
    %c0_2 = arith.constant 0 : index
    %2 = vector.load %arg2[%c0_1, %c0_2] : memref<33x4xbf16, #tpu.memory_space<vmem>>, vector<33x4xbf16>
    %cst = arith.constant dense<0.000000e+00> : vector<33x128xf32>
    %3 = tpu.matmul %2, %1, %cst {dimension_numbers = #tpu.dot_dimension_numbers<[1], [0], [0], [1], [0, 0, 1, 1], [], []>} : vector<33x4xbf16>, vector<4x128xbf16>, vector<33x128xf32> -> vector<33x128xf32>
    %c0_3 = arith.constant 0 : index
    %c0_4 = arith.constant 0 : index
    %4 = vector.load %arg3[%c0_3, %c0_4] : memref<33x1xf32, #tpu.memory_space<vmem>>, vector<33x1xf32>
    %5 = vector.broadcast %4 : vector<33x1xf32> to vector<33x128xf32>
    %6 = arith.addf %3, %5 : vector<33x128xf32>
    %cst_5 = arith.constant 0.000000e+00 : f32
    %7 = vector.broadcast %cst_5 : f32 to vector<33x128xf32>
    %8 = arith.maximumf %6, %7 : vector<33x128xf32>
    %9 = arith.truncf %8 : vector<33x128xf32> to vector<33x128xbf16>
    %c0_6 = arith.constant 0 : index
    %c0_7 = arith.constant 0 : index
    %10 = vector.load %arg4[%c0_6, %c0_7] : memref<33x33xbf16, #tpu.memory_space<vmem>>, vector<33x33xbf16>
    %cst_8 = arith.constant dense<0.000000e+00> : vector<33x128xf32>
    %11 = tpu.matmul %10, %9, %cst_8 {dimension_numbers = #tpu.dot_dimension_numbers<[1], [0], [0], [1], [0, 0, 1, 1], [], []>} : vector<33x33xbf16>, vector<33x128xbf16>, vector<33x128xf32> -> vector<33x128xf32>
    %cst_9 = arith.constant 0.000000e+00 : f32
    %12 = vector.broadcast %cst_9 : f32 to vector<33x128xf32>
    %13 = arith.maximumf %11, %12 : vector<33x128xf32>
    %14 = arith.truncf %13 : vector<33x128xf32> to vector<33x128xbf16>
    %c0_10 = arith.constant 0 : index
    %c0_11 = arith.constant 0 : index
    %15 = vector.load %arg5[%c0_10, %c0_11] : memref<2x33xbf16, #tpu.memory_space<vmem>>, vector<2x33xbf16>
    %cst_12 = arith.constant dense<0.000000e+00> : vector<2x128xf32>
    %16 = tpu.matmul %15, %14, %cst_12 {dimension_numbers = #tpu.dot_dimension_numbers<[1], [0], [0], [1], [0, 0, 1, 1], [], []>} : vector<2x33xbf16>, vector<33x128xbf16>, vector<2x128xf32> -> vector<2x128xf32>
    %c0_13 = arith.constant 0 : index
    %c0_14 = arith.constant 0 : index
    %17 = vector.load %arg6[%c0_13, %c0_14] : memref<2x128xf32, #tpu.memory_space<vmem>>, vector<2x128xf32>
    tpu.vector_store %arg6[%c0_13, %c0_14], %16 {strides = array<i32>} : memref<2x128xf32, #tpu.memory_space<vmem>>, vector<2x128xf32>,
    return
  }
  func.func @transform_0(%arg0: i32) -> (i32, i32) {
    %c0_i32 = arith.constant 0 : i32
    %c0_i32_0 = arith.constant 0 : i32
    return %c0_i32, %arg0 : i32, i32
  }
  func.func @transform_1(%arg0: i32) -> (i32, i32) {
    %c0_i32 = arith.constant 0 : i32
    %c0_i32_0 = arith.constant 0 : i32
    %c0_i32_1 = arith.constant 0 : i32
    return %c0_i32, %c0_i32_0 : i32, i32
  }
  func.func @transform_2(%arg0: i32) -> (i32, i32) {
    %c0_i32 = arith.constant 0 : i32
    %c0_i32_0 = arith.constant 0 : i32
    %c0_i32_1 = arith.constant 0 : i32
    return %c0_i32, %c0_i32_0 : i32, i32
  }
  func.func @transform_3(%arg0: i32) -> (i32, i32) {
    %c0_i32 = arith.constant 0 : i32
    %c0_i32_0 = arith.constant 0 : i32
    %c0_i32_1 = arith.constant 0 : i32
    return %c0_i32, %c0_i32_0 : i32, i32
  }
  func.func @transform_4(%arg0: i32) -> (i32, i32) {
    %c0_i32 = arith.constant 0 : i32
    %c0_i32_0 = arith.constant 0 : i32
    %c0_i32_1 = arith.constant 0 : i32
    return %c0_i32, %c0_i32_0 : i32, i32
  }
  func.func @transform_5(%arg0: i32) -> (i32, i32) {
    %c0_i32 = arith.constant 0 : i32
    %c0_i32_0 = arith.constant 0 : i32
    return %c0_i32, %arg0 : i32, i32
  }
}

</mosaic_0001>

<llo_original>
// kernel: dqn_forward.1
$region0: #{dqn_forward.1}
  #allocation0 [shape = 'u32[]', space=smem, size = 0x4, offset = 0x4, fixed_abs, tag = 'smem constant byte address 0x4 - core index']
  #allocation1 [shape = 'u32[144,128]{1,0:T(1,128)}', space=vmem, size = 0x12000, scoped, tag = 'internal scratch']
  %s0 = inlined_call_operand.vmem [shape: f32[4,128], index: 0, kind: input, shape index: {}]
  %s1 = inlined_call_operand.vmem [shape: bf16[33,4], index: 1, kind: input, shape index: {}]
  %s2 = inlined_call_operand.vmem [shape: f32[33,1], index: 2, kind: input, shape index: {}]
  %s3 = inlined_call_operand.vmem [shape: bf16[33,33], index: 3, kind: input, shape index: {}]
  %s4 = inlined_call_operand.vmem [shape: bf16[2,33], index: 4, kind: input, shape index: {}]
  %s5 = inlined_call_operand.vmem [shape: f32[2,128], index: 5, kind: output, shape index: {}]
  %s6 = sld [smem:[#allocation0]]
  $region30: #{dqn_forward.1} parent=0
    _
  %s8 = ssub.s32 1, %s6
  %s9 = scalar_select 0, %s8, %s6
  // Predicated region
  $region2: #{dqn_forward.1} parent=0 // pred_check
    _
  $region3: #{dqn_forward.1} parent=0 // pred_check_branch
    %11 = sbr.rel (0) target = $region5
  $region4: #{dqn_forward.1} parent=0 // pred_region
    _
  $region5: #{dqn_forward.1} parent=0 // pred_fallthru
    _
  // Predicated region
  $region6: #{dqn_forward.1} parent=0 // pred_check
    _
  $region7: #{dqn_forward.1} parent=0 // pred_check_branch
    %13 = sbr.rel (0) target = $region9
  $region8: #{dqn_forward.1} parent=0 // pred_region
    _
  $region9: #{dqn_forward.1} parent=0 // pred_fallthru
    _
  // Predicated region
  $region10: #{dqn_forward.1} parent=0 // pred_check
    _
  $region11: #{dqn_forward.1} parent=0 // pred_check_branch
    %15 = sbr.rel (0) target = $region13
  $region12: #{dqn_forward.1} parent=0 // pred_region
    _
  $region13: #{dqn_forward.1} parent=0 // pred_fallthru
    _
  // Predicated region
  $region14: #{dqn_forward.1} parent=0 // pred_check
    _
  $region15: #{dqn_forward.1} parent=0 // pred_check_branch
    %17 = sbr.rel (0) target = $region17
  $region16: #{dqn_forward.1} parent=0 // pred_region
    _
  $region17: #{dqn_forward.1} parent=0 // pred_fallthru
    _
  // Predicated region
  $region18: #{dqn_forward.1} parent=0 // pred_check
    _
  $region19: #{dqn_forward.1} parent=0 // pred_check_branch
    %19 = sbr.rel (0) target = $region21
  $region20: #{dqn_forward.1} parent=0 // pred_region
    _
  $region21: #{dqn_forward.1} parent=0 // pred_fallthru
    _
  %v21 = vld [vmem:[%s0] sm:$0xf]
  %v22 = vpack.c.bf16 %v21, %v21
  %v23 = vld [vmem:[%s1] sm:$0xf]
  %v24 = vld [vmem:[%s1 + $0x4] sm:$0xf]
  %v25 = vld [vmem:[%s1 + $0x8] sm:$0xf]
  %v26 = vld [vmem:[%s1 + $0xc] sm:$0xf]
  %v27 = vld [vmem:[%s1 + $0x10] sm:$0x1]
  %v28 = vld [vmem:[%s2] sm:$0xff]
  %v29 = vld [vmem:[%s2 + $0x8] sm:$0xff]
  %v30 = vld [vmem:[%s2 + $0x10] sm:$0xff]
  %v31 = vld [vmem:[%s2 + $0x18] sm:$0xff]
  %v32 = vld [vmem:[%s2 + $0x20] sm:$0x1]
  %34 = vset.pattern.permute.xlu0 0
  %35 = vperm.xlu0 %34, %v28
  %v36 = vpop.permute.xlu0 %35
  %39 = vset.pattern.permute.xlu0 0
  %40 = vperm.xlu0 %39, %v29
  %v41 = vpop.permute.xlu0 %40
  %44 = vset.pattern.permute.xlu0 0
  %45 = vperm.xlu0 %44, %v30
  %v46 = vpop.permute.xlu0 %45
  %49 = vset.pattern.permute.xlu0 0
  %50 = vperm.xlu0 %49, %v31
  %v51 = vpop.permute.xlu0 %50
  %54 = vset.pattern.permute.xlu0 0
  %55 = vperm.xlu0 %54, %v32
  %v56 = vpop.permute.xlu0 %55
  %v63 = vunpack.c.l.b16 %v23
  %v64 = vunpack.c.l.b16 %v24
  %v65 = vunpack.c.l.b16 %v25
  %v66 = vunpack.c.l.b16 %v26
  %v67 = vunpack.c.l.b16 %v27
  %v68 = vpack.c.b16 %v64, %v63
  %v69 = vpack.c.b16 %v66, %v65
  %v70 = vpack.c.b16 %v67, %v67
  %vm71 = vcmask 31744
  %v73 = vsel %vm71, %v68, 0
  %v76 = vsel %vm71, %v69, 0
  %v79 = vsel %vm71, %v70, 0
  %vm81 = vcmask 1041408
  %v83 = vsel %vm81, %v22, 0
  %85 = vmatprep.subr.bf16.mxu0 0
  %86 = vmatpush1.bf16.msra.mxu0 0
  %87 = vmatprep.subr.bf16.mxu0 0
  %88 = vmatpush1.bf16.msra.mxu0 0
  %89 = vmatprep.subr.bf16.mxu0 0
  %90 = vmatpush1.bf16.msra.mxu0 0
  %91 = vmatprep.subr.bf16.mxu0 0
  %92 = vmatpush1.bf16.msra.mxu0 0
  %93 = vmatprep.subr.bf16.mxu0 0
  %94 = vmatpush1.bf16.msra.mxu0 0
  %95 = vmatprep.subr.bf16.mxu0 0
  %96 = vmatpush1.bf16.msra.mxu0 0
  %97 = vmatprep.subr.bf16.mxu0 0
  %98 = vmatpush1.bf16.msra.mxu0 0
  %99 = vmatprep.subr.bf16.mxu0 0
  %100 = vmatpush1.bf16.msra.mxu0 %v83
  %101 = vmatprep.subr.bf16.mxu0 0
  %102 = vmatpush2.bf16.msra.mxu0 0
  %103 = vmatprep.subr.bf16.mxu0 0
  %104 = vmatpush2.bf16.msra.mxu0 0
  %105 = vmatprep.subr.bf16.mxu0 0
  %106 = vmatpush2.bf16.msra.mxu0 0
  %107 = vmatprep.subr.bf16.mxu0 0
  %108 = vmatpush2.bf16.msra.mxu0 0
  %109 = vmatprep.subr.bf16.mxu0 0
  %110 = vmatpush2.bf16.msra.mxu0 0
  %111 = vmatprep.subr.bf16.mxu0 0
  %112 = vmatpush2.bf16.msra.mxu0 0
  %113 = vmatprep.subr.bf16.mxu0 0
  %114 = vmatpush2.bf16.msra.mxu0 0
  %115 = vmatprep.subr.bf16.mxu0 0
  %116 = vmatpush2.bf16.msra.mxu0 0
  %117 = vmatprep.mubr.bf16.mxu0 0
  %118 = vmatmul.mubr.bf16.gmra.mxu0 %v73
  %v119 = vpop.f32.mrf.mxu0
  %v120 = vadd.f32 %v36, %v119
  %v121 = vpop.f32.mrf.mxu0
  %v122 = vpop.f32.mrf.mxu0
  %v123 = vadd.f32 %v41, %v122
  %v124 = vpop.f32.mrf.mxu0
  %125 = vmatprep.mubr.bf16.mxu0 0
  %126 = vmatmul.mubr.bf16.gmra.mxu0 %v76
  %v127 = vpop.f32.mrf.mxu0
  %v128 = vadd.f32 %v46, %v127
  %v129 = vpop.f32.mrf.mxu0
  %v130 = vpop.f32.mrf.mxu0
  %v131 = vadd.f32 %v51, %v130
  %v132 = vpop.f32.mrf.mxu0
  %133 = vmatprep.mubr.bf16.mxu0 0
  %134 = vmatmul.mubr.bf16.gmra.mxu0 %v79
  %v135 = vpop.f32.mrf.mxu0
  %v136 = vadd.f32 %v56, %v135
  %v137 = vpop.f32.mrf.mxu0
  %v138 = vpop.f32.mrf.mxu0
  %v139 = vpop.f32.mrf.mxu0
  %140 = vdwg.mxu0
  %v141 = vmax.f32 %v120, 0.0
  %v142 = vmax.f32 %v123, 0.0
  %v143 = vmax.f32 %v128, 0.0
  %v144 = vmax.f32 %v131, 0.0
  %v145 = vmax.f32 %v136, 0.0
  %v146 = vpack.c.bf16 %v142, %v141
  %v147 = vpack.c.bf16 %v144, %v143
  %v148 = vpack.c.bf16 %v145, %v145
  %v149 = vld [vmem:[%s3] sm:$0xf]
  %v150 = vld [vmem:[%s3 + $0x4] sm:$0xf]
  %v151 = vld [vmem:[%s3 + $0x8] sm:$0xf]
  %v152 = vld [vmem:[%s3 + $0xc] sm:$0xf]
  %v153 = vld [vmem:[%s3 + $0x10] sm:$0x1]
  %v159 = vunpack.c.l.b16 %v149
  %v160 = vunpack.c.l.b16 %v150
  %v161 = vunpack.c.l.b16 %v151
  %v162 = vunpack.c.l.b16 %v152
  %v163 = vunpack.c.l.b16 %v153
  %v164 = vpack.c.b16 %v160, %v159
  %v165 = vpack.c.b16 %v162, %v161
  %v166 = vpack.c.b16 %v163, %v163
  %vm167 = vcmask 269312
  %v169 = vsel %vm167, %v164, 0
  %v172 = vsel %vm167, %v165, 0
  %v175 = vsel %vm167, %v166, 0
  %vm177 = vcmask 1040384
  %v178 = vsel 0, 4294967295, 65535
  %v179 = vsel %vm177, %v178, 0
  %v181 = vand.u32 %v148, %v179
  %183 = vmatprep.subr.bf16.mxu0 0
  %184 = vmatpush1.bf16.msra.mxu0 0
  %185 = vmatprep.subr.bf16.mxu0 0
  %186 = vmatpush1.bf16.msra.mxu0 0
  %187 = vmatprep.subr.bf16.mxu0 0
  %188 = vmatpush1.bf16.msra.mxu0 0
  %189 = vmatprep.subr.bf16.mxu0 0
  %190 = vmatpush1.bf16.msra.mxu0 0
  %191 = vmatprep.subr.bf16.mxu0 0
  %192 = vmatpush1.bf16.msra.mxu0 0
  %193 = vmatprep.subr.bf16.mxu0 0
  %194 = vmatpush1.bf16.msra.mxu0 %v181
  %195 = vmatprep.subr.bf16.mxu0 0
  %196 = vmatpush1.bf16.msra.mxu0 %v147
  %197 = vmatprep.subr.bf16.mxu0 0
  %198 = vmatpush1.bf16.msra.mxu0 %v146
  %199 = vmatprep.subr.bf16.mxu0 0
  %200 = vmatpush2.bf16.msra.mxu0 0
  %201 = vmatprep.subr.bf16.mxu0 0
  %202 = vmatpush2.bf16.msra.mxu0 0
  %203 = vmatprep.subr.bf16.mxu0 0
  %204 = vmatpush2.bf16.msra.mxu0 0
  %205 = vmatprep.subr.bf16.mxu0 0
  %206 = vmatpush2.bf16.msra.mxu0 0
  %207 = vmatprep.subr.bf16.mxu0 0
  %208 = vmatpush2.bf16.msra.mxu0 0
  %209 = vmatprep.subr.bf16.mxu0 0
  %210 = vmatpush2.bf16.msra.mxu0 0
  %211 = vmatprep.subr.bf16.mxu0 0
  %212 = vmatpush2.bf16.msra.mxu0 0
  %213 = vmatprep.subr.bf16.mxu0 0
  %214 = vmatpush2.bf16.msra.mxu0 0
  %215 = vmatprep.mubr.bf16.mxu0 0
  %216 = vmatmul.mubr.bf16.gmra.mxu0 %v169
  %v217 = vpop.f32.mrf.mxu0
  %v218 = vadd.f32 0.0, %v217
  %v219 = vpop.f32.mrf.mxu0
  %v220 = vpop.f32.mrf.mxu0
  %v221 = vadd.f32 0.0, %v220
  %v222 = vpop.f32.mrf.mxu0
  %223 = vmatprep.mubr.bf16.mxu0 0
  %224 = vmatmul.mubr.bf16.gmra.mxu0 %v172
  %v225 = vpop.f32.mrf.mxu0
  %v226 = vadd.f32 0.0, %v225
  %v227 = vpop.f32.mrf.mxu0
  %v228 = vpop.f32.mrf.mxu0
  %v229 = vadd.f32 0.0, %v228
  %v230 = vpop.f32.mrf.mxu0
  %231 = vmatprep.mubr.bf16.mxu0 0
  %232 = vmatmul.mubr.bf16.gmra.mxu0 %v175
  %v233 = vpop.f32.mrf.mxu0
  %v234 = vadd.f32 0.0, %v233
  %v235 = vpop.f32.mrf.mxu0
  %v236 = vpop.f32.mrf.mxu0
  %v237 = vpop.f32.mrf.mxu0
  %238 = vdwg.mxu0
  %v239 = vmax.f32 %v218, 0.0
  %v240 = vmax.f32 %v221, 0.0
  %v241 = vmax.f32 %v226, 0.0
  %v242 = vmax.f32 %v229, 0.0
  %v243 = vmax.f32 %v234, 0.0
  %v244 = vpack.c.bf16 %v240, %v239
  %v245 = vpack.c.bf16 %v242, %v241
  %v246 = vpack.c.bf16 %v243, %v243
  %v247 = vld [vmem:[%s4] sm:$0x1]
  %v249 = vsel %vm167, %v247, 0
  %v252 = vand.u32 %v246, %v179
  %254 = vmatprep.subr.bf16.mxu0 0
  %255 = vmatpush1.bf16.msra.mxu0 0
  %256 = vmatprep.subr.bf16.mxu0 0
  %257 = vmatpush1.bf16.msra.mxu0 0
  %258 = vmatprep.subr.bf16.mxu0 0
  %259 = vmatpush1.bf16.msra.mxu0 0
  %260 = vmatprep.subr.bf16.mxu0 0
  %261 = vmatpush1.bf16.msra.mxu0 0
  %262 = vmatprep.subr.bf16.mxu0 0
  %263 = vmatpush1.bf16.msra.mxu0 0
  %264 = vmatprep.subr.bf16.mxu0 0
  %265 = vmatpush1.bf16.msra.mxu0 %v252
  %266 = vmatprep.subr.bf16.mxu0 0
  %267 = vmatpush1.bf16.msra.mxu0 %v245
  %268 = vmatprep.subr.bf16.mxu0 0
  %269 = vmatpush1.bf16.msra.mxu0 %v244
  %270 = vmatprep.subr.bf16.mxu0 0
  %271 = vmatpush2.bf16.msra.mxu0 0
  %272 = vmatprep.subr.bf16.mxu0 0
  %273 = vmatpush2.bf16.msra.mxu0 0
  %274 = vmatprep.subr.bf16.mxu0 0
  %275 = vmatpush2.bf16.msra.mxu0 0
  %276 = vmatprep.subr.bf16.mxu0 0
  %277 = vmatpush2.bf16.msra.mxu0 0
  %278 = vmatprep.subr.bf16.mxu0 0
  %279 = vmatpush2.bf16.msra.mxu0 0
  %280 = vmatprep.subr.bf16.mxu0 0
  %281 = vmatpush2.bf16.msra.mxu0 0
  %282 = vmatprep.subr.bf16.mxu0 0
  %283 = vmatpush2.bf16.msra.mxu0 0
  %284 = vmatprep.subr.bf16.mxu0 0
  %285 = vmatpush2.bf16.msra.mxu0 0
  %286 = vmatprep.mubr.bf16.mxu0 0
  %287 = vmatmul.mubr.bf16.gmra.mxu0 %v249
  %v288 = vpop.f32.mrf.mxu0
  %v289 = vadd.f32 0.0, %v288
  %v290 = vpop.f32.mrf.mxu0
  %v291 = vpop.f32.mrf.mxu0
  %v292 = vpop.f32.mrf.mxu0
  %293 = vdwg.mxu0
  %294 = vst [vmem:[%s5] sm:$0x3] %v289
  // Predicated region
  $region22: #{dqn_forward.1} parent=0 // pred_check
    _
  $region23: #{dqn_forward.1} parent=0 // pred_check_branch
    %296 = sbr.rel (0) target = $region25
  $region24: #{dqn_forward.1} parent=0 // pred_region
    _
  $region25: #{dqn_forward.1} parent=0 // pred_fallthru
    _
  // Predicated region
  $region26: #{dqn_forward.1} parent=0 // pred_check
    _
  $region27: #{dqn_forward.1} parent=0 // pred_check_branch
    %298 = sbr.rel (0) target = $region29
  $region28: #{dqn_forward.1} parent=0 // pred_region
    _
  $region29: #{dqn_forward.1} parent=0 // pred_fallthru
    _

</llo_original>
